<compile_context>
chip_gen: v5e
topology: v5e:2x2
jax: 0.10.0
libtpu: 0.0.40
codegen_flags: <defaults>
</compile_context>

<pallas_src>
import jax
import jax.numpy as jnp
from jax.experimental import pallas as pl
from jax.experimental.pallas import tpu as pltpu


def _llatent_corr_kernel(x_ref, w1t_ref, w2_ref, o_ref):
    # x_ref:   (1, 1)       SMEM scalar (== 1.0 in the module; kept general)
    # w1t_ref: (1, ndim)    W1^T (f32), constant block index -> resident
    # w2_ref:  (TN, ndim)   rows [j*TN, (j+1)*TN) of the UNtransposed W2
    # o_ref:   (1, TN)      output tile (f32)
    x = x_ref[0, 0]

    # First linear (no bias) + LeakyReLU(0.2): h = leaky_relu(x * W1^T).
    h = x * w1t_ref[...]                              # (1, ndim) f32, VPU
    h = jnp.where(h > 0, h, 0.2 * h)

    # Second linear (no bias): y[0, j] = sum_k h[0, k] * W2[row0 + j, k]
    # (== h @ W2.T for this row tile).  h is cast to W2's storage dtype so a
    # bf16 W2 feeds the MXU directly (no whole-tile convert); accumulate in f32.
    y = jax.lax.dot_general(
        h.astype(w2_ref.dtype), w2_ref[...],
        dimension_numbers=(((1,), (1,)), ((), ())),
        preferred_element_type=jnp.float32,
    )                                                 # (1, TN) f32

    o_ref[...] = jnp.tanh(y).astype(o_ref.dtype)


_TN_CANDIDATES = (2048, 1024, 512, 256, 128)


def _tpu_vmem_info():
    """Returns (vmem_capacity_bytes, is_v7x) with safe fallbacks."""
    try:
        cap = int(pltpu.get_tpu_info().vmem_capacity_bytes)
    except Exception:
        cap = 128 << 20
    is_v7x = (48 << 20) <= cap <= (80 << 20)   # v7x: 64 MiB per TensorCore
    return cap, is_v7x


def _pick_tn(ndim, w2_itemsize, budget_bytes):
    """Largest row tile whose double-buffered (TN, ndim) W2 block fits the budget."""
    for tn in _TN_CANDIDATES:
        if tn <= ndim and 2 * tn * ndim * w2_itemsize <= budget_bytes:
            return tn
    return 128


def _xla_forward(x, w1, w2):
    """Fused XLA path for small ndim (launch/grid overhead would dominate)."""
    ndim = w1.shape[0]
    h = jnp.asarray(x, jnp.float32).reshape(1, 1) * jnp.asarray(w1, jnp.float32).reshape(1, ndim)
    h = jnp.where(h > 0, h, 0.2 * h)
    y = jnp.dot(h.astype(w2.dtype), w2.T, preferred_element_type=jnp.float32)
    return jnp.tanh(y)[0].astype(jnp.float32)


def llatent_corr_forward(x, w1, w2, *, min_pallas_ndim=512):
    """LLatentCorr forward.

    x: (1,) float, w1: (ndim, 1), w2: (ndim, ndim) in its *storage* dtype
    (f32 or bf16 — no per-call cast is performed).  Returns (ndim,) float32.
    """
    ndim = w1.shape[0]
    w2 = jnp.asarray(w2)
    assert w2.shape == (ndim, ndim)

    # Small sizes: the whole W2 is a few KiB; the fused XLA path is strictly faster.
    if ndim < max(min_pallas_ndim, 128):
        return _xla_forward(x, w1, w2)

    x2 = jnp.asarray(x, jnp.float32).reshape(1, 1)
    # (ndim, 1) -> (1, ndim) is a contiguous reshape for a vector, not a copy.
    w1t = jnp.asarray(w1, jnp.float32).reshape(1, ndim)

    itemsize = jnp.dtype(w2.dtype).itemsize
    vmem_cap, is_v7x = _tpu_vmem_info()
    # Double-buffer budget for the W2 stream: larger steps on v7x (fast HBM),
    # ~32 MiB on the 128-MiB-VMEM chips, scaled down on anything smaller.
    if is_v7x:
        budget = 36 << 20
    else:
        budget = min(32 << 20, max(vmem_cap // 4, 4 << 20))
    tn = _pick_tn(ndim, itemsize, budget)
    grid_n = pl.cdiv(ndim, tn)

    # Explicit VMEM limit covering the double-buffered W2 tile + residents
    # (never clamped below the actual need).
    vmem_need = 2 * tn * ndim * itemsize + 2 * ndim * 4 + 2 * tn * 4
    vmem_limit = min(max(vmem_need + (4 << 20), 16 << 20), vmem_cap)

    # v7x has 2 TensorCores: CORE_PARALLEL lets each core stream half of W2
    # with its own DMA engine.  Plain PARALLEL elsewhere (1 TC per chip).
    if is_v7x and grid_n >= 2:
        dim_sem = (pltpu.CORE_PARALLEL,)
    else:
        dim_sem = (pltpu.PARALLEL,)

    cost = pl.CostEstimate(
        flops=2 * ndim * ndim + 2 * ndim,
        transcendentals=ndim,
        bytes_accessed=ndim * ndim * itemsize + 2 * ndim * 4 + 4 * ndim,
    )

    out = pl.pallas_call(
        _llatent_corr_kernel,
        out_shape=jax.ShapeDtypeStruct((1, ndim), jnp.float32),
        grid_spec=pltpu.PrefetchScalarGridSpec(
            num_scalar_prefetch=0,
            grid=(grid_n,),
            in_specs=[
                # scalar input -> SMEM (no padded VMEM tile, no per-step DMA)
                pl.BlockSpec(memory_space=pltpu.MemorySpace.SMEM),
                # W1^T: constant block index -> stays resident across grid steps
                pl.BlockSpec((1, ndim), lambda j: (0, 0)),
                # W2: one row tile per step, double-buffered by BlockSpec; the
                # partial last block is masked -> no wrapper-side padding copy.
                pl.BlockSpec((tn, ndim), lambda j: (j, 0)),
            ],
            out_specs=pl.BlockSpec((1, tn), lambda j: (0, j)),
        ),
        compiler_params=pltpu.CompilerParams(
            dimension_semantics=dim_sem,
            vmem_limit_bytes=int(vmem_limit),
        ),
        cost_estimate=cost,
    )(x2, w1t, w2)
    return out[0]


def _reference(x, w1, w2):
    h = jnp.asarray(x, jnp.float32).reshape(1, 1) @ jnp.asarray(w1, jnp.float32).T
    h = jnp.where(h > 0, h, 0.2 * h)
    y = h @ jnp.asarray(w2, jnp.float32).T
    return jnp.tanh(y)[0]


if __name__ == "__main__":
    key = jax.random.PRNGKey(0)
    k1, k2, k3, k4 = jax.random.split(key, 4)
    x = jnp.array([1.0], dtype=jnp.float32)   # the module always feeds [1.0]

    # --- Case 1: module-default small ndim -> fused XLA fast path. ---
    ndim_s = 32
    w1_s = jax.random.uniform(k1, (ndim_s, 1), jnp.float32, -1.0, 1.0)          # fan_in = 1
    b_s = 1.0 / float(ndim_s) ** 0.5
    w2_s = jax.random.uniform(k2, (ndim_s, ndim_s), jnp.float32, -b_s, b_s)
    out_s = jax.block_until_ready(llatent_corr_forward(x, w1_s, w2_s))
    ref_s = _reference(x, w1_s, w2_s)
    assert out_s.shape == (ndim_s,)
    assert jnp.allclose(out_s, ref_s, atol=1e-5, rtol=1e-5)

    # --- Case 2: non-128-multiple ndim -> Pallas path (partial blocks, no
    #     padding copy); forced on so the kernel is exercised at small scale. ---
    ndim = 300
    w1 = jax.random.uniform(k3, (ndim, 1), jnp.float32, -1.0, 1.0)
    b = 1.0 / float(ndim) ** 0.5
    w2 = jax.random.uniform(k4, (ndim, ndim), jnp.float32, -b, b)
    out = jax.block_until_ready(llatent_corr_forward(x, w1, w2, min_pallas_ndim=0))
    ref = _reference(x, w1, w2)
    assert out.shape == (ndim,)
    assert jnp.allclose(out, ref, atol=1e-4, rtol=1e-4)

    # --- Case 3: W2 stored persistently in bf16 (halves the HBM stream). ---
    w2_bf16 = w2.astype(jnp.bfloat16)
    out_bf = jax.block_until_ready(llatent_corr_forward(x, w1, w2_bf16, min_pallas_ndim=0))
    assert out_bf.shape == (ndim,)
    assert jnp.allclose(out_bf, ref, atol=3e-2, rtol=3e-2)

    print("KERNEL_OK")
</pallas_src>

<mosaic_0001>
module attributes {stable_mosaic.version = 11 : i64} {
  func.func @_llatent_corr_kernel(%arg0: i32, %arg1: memref<1x1xf32, #tpu.memory_space<smem>>, %arg2: memref<1x300xf32, #tpu.memory_space<vmem>>, %arg3: memref<256x300xf32, #tpu.memory_space<vmem>>, %arg4: memref<1x256xf32, #tpu.memory_space<vmem>>) attributes {dimension_semantics = [#tpu.dimension_semantics<parallel>], iteration_bounds = array<i64: 2>, scalar_prefetch = 0 : i64, scratch_operands = 0 : i64, tpu.core_type = #tpu.core_type<tc>, window_params = [{transform_indices = @transform_0, window_bounds = array<i64: 1, 1>}, {pipeline_mode = #tpu.pipeline_mode<synchronous>, transform_indices = @transform_1, window_bounds = array<i64: 1, 300>}, {transform_indices = @transform_2, window_bounds = array<i64: 256, 300>}, {transform_indices = @transform_3, window_bounds = array<i64: 1, 256>}]} {
    %c0 = arith.constant 0 : index
    %c0_0 = arith.constant 0 : index
    %0 = memref.load %arg1[%c0, %c0_0] : memref<1x1xf32, #tpu.memory_space<smem>>
    %c0_1 = arith.constant 0 : index
    %c0_2 = arith.constant 0 : index
    %1 = vector.load %arg2[%c0_1, %c0_2] : memref<1x300xf32, #tpu.memory_space<vmem>>, vector<1x300xf32>
    %2 = vector.broadcast %0 : f32 to vector<1x300xf32>
    %3 = arith.mulf %2, %1 : vector<1x300xf32>
    %cst = arith.constant 0.000000e+00 : f32
    %4 = vector.broadcast %cst : f32 to vector<1x300xf32>
    %5 = arith.cmpf ogt, %3, %4 : vector<1x300xf32>
    %cst_3 = arith.constant 2.000000e-01 : f32
    %6 = vector.broadcast %cst_3 : f32 to vector<1x300xf32>
    %7 = arith.mulf %6, %3 : vector<1x300xf32>
    %8 = arith.select %5, %3, %7 : vector<1x300xi1>, vector<1x300xf32>
    %c0_4 = arith.constant 0 : index
    %c0_5 = arith.constant 0 : index
    %9 = vector.load %arg3[%c0_4, %c0_5] : memref<256x300xf32, #tpu.memory_space<vmem>>, vector<256x300xf32>
    %cst_6 = arith.constant dense<0.000000e+00> : vector<1x256xf32>
    %10 = tpu.matmul %8, %9, %cst_6 {dimension_numbers = #tpu.dot_dimension_numbers<[1], [1], [0], [0], [0, 0, 1, 0], [], []>} : vector<1x300xf32>, vector<256x300xf32>, vector<1x256xf32> -> vector<1x256xf32>
    %11 = math.tanh %10 : vector<1x256xf32>
    %c0_7 = arith.constant 0 : index
    %c0_8 = arith.constant 0 : index
    %12 = vector.load %arg4[%c0_7, %c0_8] : memref<1x256xf32, #tpu.memory_space<vmem>>, vector<1x256xf32>
    tpu.vector_store %arg4[%c0_7, %c0_8], %11 {strides = array<i32>} : memref<1x256xf32, #tpu.memory_space<vmem>>, vector<1x256xf32>,
    return
  }
  func.func @transform_0(%arg0: i32) -> (i32, i32) {
    %c0_i32 = arith.constant 0 : i32
    %c0_i32_0 = arith.constant 0 : i32
    %c0_i32_1 = arith.constant 0 : i32
    return %c0_i32, %c0_i32_0 : i32, i32
  }
  func.func @transform_1(%arg0: i32) -> (i32, i32) {
    %c0_i32 = arith.constant 0 : i32
    %c0_i32_0 = arith.constant 0 : i32
    %c0_i32_1 = arith.constant 0 : i32
    return %c0_i32, %c0_i32_0 : i32, i32
  }
  func.func @transform_2(%arg0: i32) -> (i32, i32) {
    %c0_i32 = arith.constant 0 : i32
    %c0_i32_0 = arith.constant 0 : i32
    return %arg0, %c0_i32 : i32, i32
  }
  func.func @transform_3(%arg0: i32) -> (i32, i32) {
    %c0_i32 = arith.constant 0 : i32
    %c0_i32_0 = arith.constant 0 : i32
    return %c0_i32, %arg0 : i32, i32
  }
}

</mosaic_0001>

<llo_original>
// kernel: tpu_custom_call.1
$region0: #{tpu_custom_call.1}
  #allocation0 [shape = 'u32[]', space=smem, size = 0x4, offset = 0x4, fixed_abs, tag = 'smem constant byte address 0x4 - core index']
  #allocation1 [shape = 'u32[72,128]{1,0:T(1,128)}', space=vmem, size = 0x9000, scoped, tag = 'internal scratch']
  #allocation2 [shape = 'f32[1,1]{1,0:T(1,128)S(6)}', space=smem, size = 0x200, scoped, tag = 'scoped memory for tpu_custom_call.1']
  %s0 = inlined_call_operand.<no memory space> [shape: f32[1,1], index: 0, kind: input, shape index: {}]
  %s1 = inlined_call_operand.hbm [shape: f32[1,300], index: 1, kind: input, shape index: {}]
  %s2 = inlined_call_operand.hbm [shape: f32[300,300], index: 2, kind: input, shape index: {}]
  %s3 = inlined_call_operand.hbm [shape: f32[1,300], index: 3, kind: output, shape index: {}]
  %s4 = sld [smem:[#allocation0]]
  $region53: #{tpu_custom_call.1} parent=0
    _
  %s6 = ssub.s32 1, %s4
  %s7 = scalar_select 0, %s6, %s4
  %8 = sst [smem:[#allocation2]] %s0
  $region1: #{tpu_custom_call.1} parent=0
    #allocation3 [shape = 'u8[1536]{0}', space=vmem, size = 0x800, scoped, tag = 'input window, operand 1, single buffered']
    #allocation4 [shape = 's32[2]{0}', space=sflag, size = 0x8, scoped, tag = 'scoped memory for tpu_custom_call.1']
    #allocation5 [shape = 's32[2]{0}', space=sflag, size = 0x8, scoped, tag = 'scoped memory for tpu_custom_call.1']
    #allocation6 [shape = 'u8[786432]{0}', space=vmem, size = 0xc0000, scoped, tag = 'input window, operand 2']
    #allocation7 [shape = 's32[2]{0}', space=sflag, size = 0x8, scoped, tag = 'scoped memory for tpu_custom_call.1']
    #allocation8 [shape = 'u8[2048]{0}', space=vmem, size = 0x800, scoped, tag = 'output window, operand 0']
    %9 = vsyncpa [#allocation4], 0
    %10 = vsyncpa [#allocation7], 0
    %s11 = scalar_lea.sflag [#allocation7], 1
    %12 = vsyncpa %s11, 0
    %13 = vsyncpa [#allocation5], 0
    %s14 = scalar_lea.sflag [#allocation5], 1
    %15 = vsyncpa %s14, 0
    loop: start=0, step=1, limit=4
    $region2: #{tpu_custom_call.1} parent=1 // loop_pre_header
      _
    $region3: #{tpu_custom_call.1} parent=1 // loop_header
      %s17 = sphi 0, %s21
      %p18 = scmp.ge.s32.totalorder %s17, 4
      %s25 = sphi 0, %s25
      %s27 = sphi 0, %s25
      %s28 = sphi 0, %s27
      %s42 = sphi 0, %s28
      %s46 = sphi 0, %s46
      %s48 = sphi 0, %s46
      %s49 = sphi 0, %s48
      %s63 = sphi 0, %s49
      %s69 = sphi 0, %s71
      %s72 = sphi 0, %s69
      %s73 = sphi 0, %s72
      %s89 = sphi 0, %s73
      %s95 = sphi 0, %s97
      %s98 = sphi 0, %s95
      %s99 = sphi 0, %s98
      %s115 = sphi 0, %s99
    $region4: #{tpu_custom_call.1} parent=1 // loop_header_branch
      %20 = sbr.rel (%p18) target = $region8
    $region5: #{tpu_custom_call.1} parent=1 // loop_body
      %s22 = ssub.s32 %s17, 1
      %s23 = ssub.s32 %s17, 2
      %s24 = sadd.s32 %s17, 1
      %s26 = sadd.s32 %s25, 1
      %p29 = scmp.eq.s32.totalorder %s17, 1
      %p30 = scmp.ne.s32.totalorder %s25, %s27
      %p31 = scmp.eq.s32.totalorder %s17, 0
      %p32 = por %p30, %p31
      %p33 = scmp.ne.s32.totalorder %s25, %s27
      %p34 = scmp.eq.s32.totalorder %s22, 1
      %p35 = por %p33, %p34
      %p36 = scmp.ne.s32.totalorder %s27, %s28
      %p37 = scmp.eq.s32.totalorder %s22, 0
      %p38 = por %p36, %p37
      %p39 = scmp.ne.s32.totalorder %s27, %s28
      %p40 = scmp.eq.s32.totalorder %s23, 1
      %p41 = por %p39, %p40
      %p43 = scmp.ne.s32.totalorder %s28, %s42
      %p44 = scmp.eq.s32.totalorder %s23, 0
      %p45 = por %p43, %p44
      %s47 = sadd.s32 %s46, 1
      %p50 = scmp.eq.s32.totalorder %s17, 1
      %p51 = scmp.ne.s32.totalorder %s46, %s48
      %p52 = scmp.eq.s32.totalorder %s17, 0
      %p53 = por %p51, %p52
      %p54 = scmp.ne.s32.totalorder %s46, %s48
      %p55 = scmp.eq.s32.totalorder %s22, 1
      %p56 = por %p54, %p55
      %p57 = scmp.ne.s32.totalorder %s48, %s49
      %p58 = scmp.eq.s32.totalorder %s22, 0
      %p59 = por %p57, %p58
      %p60 = scmp.ne.s32.totalorder %s48, %s49
      %p61 = scmp.eq.s32.totalorder %s23, 1
      %p62 = por %p60, %p61
      %p64 = scmp.ne.s32.totalorder %s49, %s63
      %p65 = scmp.eq.s32.totalorder %s23, 0
      %p66 = por %p64, %p65
      %s67 = ssub.s32 %s17, %s24
      %p68 = scmp.eq.s32.totalorder %s67, 0
      %s70 = sadd.s32 %s69, 1
      %s71 = scalar_select %p68, %s69, %s70
      %p74 = pneg %p68
      %p75 = scmp.eq.s32.totalorder %s17, 1
      %p76 = por %p74, %p75
      %p77 = scmp.ne.s32.totalorder %s69, %s72
      %p78 = scmp.eq.s32.totalorder %s17, 0
      %p79 = por %p77, %p78
      %p80 = scmp.ne.s32.totalorder %s69, %s72
      %p81 = scmp.eq.s32.totalorder %s22, 1
      %p82 = por %p80, %p81
      %p83 = scmp.ne.s32.totalorder %s72, %s73
      %p84 = scmp.eq.s32.totalorder %s22, 0
      %p85 = por %p83, %p84
      %p86 = scmp.ne.s32.totalorder %s72, %s73
      %p87 = scmp.eq.s32.totalorder %s23, 1
      %p88 = por %p86, %p87
      %p90 = scmp.ne.s32.totalorder %s73, %s89
      %p91 = scmp.eq.s32.totalorder %s23, 0
      %p92 = por %p90, %p91
      %s93 = ssub.s32 %s17, %s24
      %p94 = scmp.eq.s32.totalorder %s93, 0
      %s96 = sadd.s32 %s95, 1
      %s97 = scalar_select %p94, %s95, %s96
      %p100 = pneg %p94
      %p101 = scmp.eq.s32.totalorder %s17, 1
      %p102 = por %p100, %p101
      %p103 = scmp.ne.s32.totalorder %s95, %s98
      %p104 = scmp.eq.s32.totalorder %s17, 0
      %p105 = por %p103, %p104
      %p106 = scmp.ne.s32.totalorder %s95, %s98
      %p107 = scmp.eq.s32.totalorder %s22, 1
      %p108 = por %p106, %p107
      %p109 = scmp.ne.s32.totalorder %s98, %s99
      %p110 = scmp.eq.s32.totalorder %s22, 0
      %p111 = por %p109, %p110
      %p112 = scmp.ne.s32.totalorder %s98, %s99
      %p113 = scmp.eq.s32.totalorder %s23, 1
      %p114 = por %p112, %p113
      %p116 = scmp.ne.s32.totalorder %s99, %s115
      %p117 = scmp.eq.s32.totalorder %s23, 0
      %p118 = por %p116, %p117
      %p119 = scmp.le.s32.totalorder 1, %s17
      %p120 = scmp.lt.s32.totalorder %s17, 3
      %p121 = pnand %p119, %p120
      %p122 = pneg %p121
      // Predicated region
      $region9: #{tpu_custom_call.1} parent=5 // pred_check
        _
      $region10: #{tpu_custom_call.1} parent=5 // pred_check_branch
        %124 = sbr.rel (%p121) target = $region12
      $region11: #{tpu_custom_call.1} parent=5 // pred_region
        %s125 = ssub.s32 %s17, 1
        // Predicated region
        $region13: #{tpu_custom_call.1} parent=11 // pred_check
          %p126 = pneg %p38
        $region14: #{tpu_custom_call.1} parent=11 // pred_check_branch
          %128 = sbr.rel (%p126) target = $region16
        $region15: #{tpu_custom_call.1} parent=11 // pred_region
          _
        $region16: #{tpu_custom_call.1} parent=11 // pred_fallthru
          _
        // Predicated region
        $region17: #{tpu_custom_call.1} parent=11 // pred_check
          %p129 = pneg %p59
        $region18: #{tpu_custom_call.1} parent=11 // pred_check_branch
          %131 = sbr.rel (%p129) target = $region20
        $region19: #{tpu_custom_call.1} parent=11 // pred_region
          %133 = vsyncadd [#allocation4], 0
          %s135 = sshll.u32 %s1, 4
          %s136 = int_to_ptr.hbm [resolvable:$true] %s135
          %s137 = sshll.u32 [#allocation3], 4
          %s138 = int_to_ptr.vmem [resolvable:$true] %s137
          %140 = dma.hbm_to_vmem [thread:$0]  %s136, 48, %s138, [#allocation4]
        $region20: #{tpu_custom_call.1} parent=11 // pred_fallthru
          _
      $region12: #{tpu_custom_call.1} parent=5 // pred_fallthru
        _
      %p141 = scmp.lt.s32.totalorder %s17, 2
      // Predicated region
      $region21: #{tpu_custom_call.1} parent=5 // pred_check
        %p142 = pneg %p141
      $region22: #{tpu_custom_call.1} parent=5 // pred_check_branch
        %144 = sbr.rel (%p142) target = $region24
      $region23: #{tpu_custom_call.1} parent=5 // pred_region
        // Predicated region
        $region25: #{tpu_custom_call.1} parent=23 // pred_check
          %p145 = pneg %p79
        $region26: #{tpu_custom_call.1} parent=23 // pred_check_branch
          %147 = sbr.rel (%p145) target = $region28
        $region27: #{tpu_custom_call.1} parent=23 // pred_region
          %s148 = sand.u32 %s69, 1
          %s149 = scalar_lea.sflag [#allocation7], %s148
          %s150 = sand.u32 %s69, 1
          %s151 = smul.addr %s150, 768
          %s152 = scalar_lea.vmem [#allocation6], %s151
          %s153 = smul.u32 32, %s17
          %s154 = ssub.s32 38, %s153
          %p155 = scmp.lt.s32.totalorder %s154, 32
          %s156 = scalar_select %p155, %s154, 32
          %s157 = smul.u32 8, %s156
          %s158 = smul.u32 %s157, 3
          %s159 = ssub.s32 768, %s158
          %s160 = sshll.u32 %s159, 4
          %161 = vsyncadd %s149, %s160
          %p162 = scmp.ne.s32.totalorder 0, %s158
          %s163 = smul.addr %s153, 3
          %s164 = smul.addr %s163, 8
          %s165 = scalar_lea.hbm %s2, %s164
          %s166 = smul.u32 24, %s156
          %s167 = sshll.u32 %s165, 4
          %s168 = int_to_ptr.hbm [resolvable:$true] %s167
          %s169 = sshll.u32 %s152, 4
          %s170 = int_to_ptr.vmem [resolvable:$true] %s169
          %s171 = sshll.u32 %s166, 4
          %175 = dma.hbm_to_vmem [thread:$0]  (%p162), %s168, %s171, %s170, %s149, 384, 384, 24
        $region28: #{tpu_custom_call.1} parent=23 // pred_fallthru
          _
      $region24: #{tpu_custom_call.1} parent=5 // pred_fallthru
        _
      %p176 = scmp.le.s32.totalorder 1, %s17
      %p177 = scmp.lt.s32.totalorder %s17, 3
      %p178 = pnand %p176, %p177
      %p179 = pneg %p178
      // Predicated region
      $region29: #{tpu_custom_call.1} parent=5 // pred_check
        _
      $region30: #{tpu_custom_call.1} parent=5 // pred_check_branch
        %181 = sbr.rel (%p178) target = $region32
      $region31: #{tpu_custom_call.1} parent=5 // pred_region
        %s182 = ssub.s32 %s17, 1
        // Predicated region
        $region33: #{tpu_custom_call.1} parent=31 // pred_check
          %p183 = pneg %p59
        $region34: #{tpu_custom_call.1} parent=31 // pred_check_branch
          %185 = sbr.rel (%p183) target = $region36
        $region35: #{tpu_custom_call.1} parent=31 // pred_region
          %187 = dma.done [#allocation4], 48
        $region36: #{tpu_custom_call.1} parent=31 // pred_fallthru
          _
        %s188 = sand.u32 %s72, 1
        %s189 = scalar_lea.sflag [#allocation7], %s188
        %s190 = sand.u32 %s72, 1
        %s191 = smul.addr %s190, 768
        %s192 = scalar_lea.vmem [#allocation6], %s191
        // Predicated region
        $region37: #{tpu_custom_call.1} parent=31 // pred_check
          %p193 = pneg %p85
        $region38: #{tpu_custom_call.1} parent=31 // pred_check_branch
          %195 = sbr.rel (%p193) target = $region40
        $region39: #{tpu_custom_call.1} parent=31 // pred_region
          %197 = dma.done %s189, 12288
        $region40: #{tpu_custom_call.1} parent=31 // pred_fallthru
          _
        %p198 = pneg %p38
        %p199 = pneg %p35
        %p200 = pneg %p59
        %p201 = pneg %p56
        %s202 = sand.u32 %s72, 1
        %s203 = scalar_lea.sflag [#allocation7], %s202
        %s204 = sand.u32 %s72, 1
        %s205 = smul.addr %s204, 768
        %s206 = scalar_lea.vmem [#allocation6], %s205
        %p207 = pneg %p85
        %p208 = pneg %p82
        %p209 = pneg %p111
        %p210 = pneg %p108
        %s211 = sand.u32 %s98, 1
        %s212 = scalar_lea.sflag [#allocation5], %s211
        %s213 = sand.u32 %s98, 1
        %s214 = smul.addr %s213, 2
        %s215 = scalar_lea.vmem [#allocation8], %s214
        %s216 = smul.u32 32, %s22
        %s217 = ssub.s32 38, %s216
        %p218 = scmp.lt.s32.totalorder %s217, 32
        %s219 = scalar_select %p218, %s217, 32
        %s220 = smul.u32 8, %s219
        %s221 = smul.u32 %s220, 3
        %s222 = smul.u32 2, %s22
        %s223 = ssub.s32 3, %s222
        %p224 = scmp.lt.s32.totalorder %s223, 2
        %s225 = scalar_select %p224, %s223, 2
        %s226 = sld [smem:[#allocation2]]
        %v227 = vld [vmem:[#allocation3] sm:$0x7]
        %v228 = vstv %s226
        %v229 = vmul.f32 %v228, %v227
        %vm230 = vcmp.gt.f32.partialorder %v229, 0.0
        %v231 = vmul.f32 %v229, 0.2
        %v232 = vsel %vm230, %v229, %v231
        %v233 = vld [vmem:[%s192] sm:$0xff]
        %v234 = vld [vmem:[%s192 + $0x8] sm:$0xff]
        %v235 = vld [vmem:[%s192 + $0x10] sm:$0xff]
        %v236 = vld [vmem:[%s192 + $0x18] sm:$0xff]
        %v237 = vld [vmem:[%s192 + $0x20] sm:$0xff]
        %v238 = vld [vmem:[%s192 + $0x28] sm:$0xff]
        %v239 = vld [vmem:[%s192 + $0x30] sm:$0xff]
        %v240 = vld [vmem:[%s192 + $0x38] sm:$0xff]
        %v241 = vld [vmem:[%s192 + $0x40] sm:$0xff]
        %v242 = vld [vmem:[%s192 + $0x48] sm:$0xff]
        %v243 = vld [vmem:[%s192 + $0x50] sm:$0xff]
        %v244 = vld [vmem:[%s192 + $0x58] sm:$0xff]
        %v245 = vld [vmem:[%s192 + $0x60] sm:$0xff]
        %v246 = vld [vmem:[%s192 + $0x68] sm:$0xff]
        %v247 = vld [vmem:[%s192 + $0x70] sm:$0xff]
        %v248 = vld [vmem:[%s192 + $0x78] sm:$0xff]
        %v249 = vld [vmem:[%s192 + $0x80] sm:$0xff]
        %v250 = vld [vmem:[%s192 + $0x88] sm:$0xff]
        %v251 = vld [vmem:[%s192 + $0x90] sm:$0xff]
        %v252 = vld [vmem:[%s192 + $0x98] sm:$0xff]
        %v253 = vld [vmem:[%s192 + $0xa0] sm:$0xff]
        %v254 = vld [vmem:[%s192 + $0xa8] sm:$0xff]
        %v255 = vld [vmem:[%s192 + $0xb0] sm:$0xff]
        %v256 = vld [vmem:[%s192 + $0xb8] sm:$0xff]
        %v257 = vld [vmem:[%s192 + $0xc0] sm:$0xff]
        %v258 = vld [vmem:[%s192 + $0xc8] sm:$0xff]
        %v259 = vld [vmem:[%s192 + $0xd0] sm:$0xff]
        %v260 = vld [vmem:[%s192 + $0xd8] sm:$0xff]
        %v261 = vld [vmem:[%s192 + $0xe0] sm:$0xff]
        %v262 = vld [vmem:[%s192 + $0xe8] sm:$0xff]
        %v263 = vld [vmem:[%s192 + $0xf0] sm:$0xff]
        %v264 = vld [vmem:[%s192 + $0xf8] sm:$0xff]
        %v265 = vld [vmem:[%s192 + $0x100] sm:$0xff]
        %v266 = vld [vmem:[%s192 + $0x108] sm:$0xff]
        %v267 = vld [vmem:[%s192 + $0x110] sm:$0xff]
        %v268 = vld [vmem:[%s192 + $0x118] sm:$0xff]
        %v269 = vld [vmem:[%s192 + $0x120] sm:$0xff]
        %v270 = vld [vmem:[%s192 + $0x128] sm:$0xff]
        %v271 = vld [vmem:[%s192 + $0x130] sm:$0xff]
        %v272 = vld [vmem:[%s192 + $0x138] sm:$0xff]
        %v273 = vld [vmem:[%s192 + $0x140] sm:$0xff]
        %v274 = vld [vmem:[%s192 + $0x148] sm:$0xff]
        %v275 = vld [vmem:[%s192 + $0x150] sm:$0xff]
        %v276 = vld [vmem:[%s192 + $0x158] sm:$0xff]
        %v277 = vld [vmem:[%s192 + $0x160] sm:$0xff]
        %v278 = vld [vmem:[%s192 + $0x168] sm:$0xff]
        %v279 = vld [vmem:[%s192 + $0x170] sm:$0xff]
        %v280 = vld [vmem:[%s192 + $0x178] sm:$0xff]
        %v281 = vld [vmem:[%s192 + $0x180] sm:$0xff]
        %v282 = vld [vmem:[%s192 + $0x188] sm:$0xff]
        %v283 = vld [vmem:[%s192 + $0x190] sm:$0xff]
        %v284 = vld [vmem:[%s192 + $0x198] sm:$0xff]
        %v285 = vld [vmem:[%s192 + $0x1a0] sm:$0xff]
        %v286 = vld [vmem:[%s192 + $0x1a8] sm:$0xff]
        %v287 = vld [vmem:[%s192 + $0x1b0] sm:$0xff]
        %v288 = vld [vmem:[%s192 + $0x1b8] sm:$0xff]
        %v289 = vld [vmem:[%s192 + $0x1c0] sm:$0xff]
        %v290 = vld [vmem:[%s192 + $0x1c8] sm:$0xff]
        %v291 = vld [vmem:[%s192 + $0x1d0] sm:$0xff]
        %v292 = vld [vmem:[%s192 + $0x1d8] sm:$0xff]
        %v293 = vld [vmem:[%s192 + $0x1e0] sm:$0xff]
        %v294 = vld [vmem:[%s192 + $0x1e8] sm:$0xff]
        %v295 = vld [vmem:[%s192 + $0x1f0] sm:$0xff]
        %v296 = vld [vmem:[%s192 + $0x1f8] sm:$0xff]
        %v297 = vld [vmem:[%s192 + $0x200] sm:$0xff]
        %v298 = vld [vmem:[%s192 + $0x208] sm:$0xff]
        %v299 = vld [vmem:[%s192 + $0x210] sm:$0xff]
        %v300 = vld [vmem:[%s192 + $0x218] sm:$0xff]
        %v301 = vld [vmem:[%s192 + $0x220] sm:$0xff]
        %v302 = vld [vmem:[%s192 + $0x228] sm:$0xff]
        %v303 = vld [vmem:[%s192 + $0x230] sm:$0xff]
        %v304 = vld [vmem:[%s192 + $0x238] sm:$0xff]
        %v305 = vld [vmem:[%s192 + $0x240] sm:$0xff]
        %v306 = vld [vmem:[%s192 + $0x248] sm:$0xff]
        %v307 = vld [vmem:[%s192 + $0x250] sm:$0xff]
        %v308 = vld [vmem:[%s192 + $0x258] sm:$0xff]
        %v309 = vld [vmem:[%s192 + $0x260] sm:$0xff]
        %v310 = vld [vmem:[%s192 + $0x268] sm:$0xff]
        %v311 = vld [vmem:[%s192 + $0x270] sm:$0xff]
        %v312 = vld [vmem:[%s192 + $0x278] sm:$0xff]
        %v313 = vld [vmem:[%s192 + $0x280] sm:$0xff]
        %v314 = vld [vmem:[%s192 + $0x288] sm:$0xff]
        %v315 = vld [vmem:[%s192 + $0x290] sm:$0xff]
        %v316 = vld [vmem:[%s192 + $0x298] sm:$0xff]
        %v317 = vld [vmem:[%s192 + $0x2a0] sm:$0xff]
        %v318 = vld [vmem:[%s192 + $0x2a8] sm:$0xff]
        %v319 = vld [vmem:[%s192 + $0x2b0] sm:$0xff]
        %v320 = vld [vmem:[%s192 + $0x2b8] sm:$0xff]
        %v321 = vld [vmem:[%s192 + $0x2c0] sm:$0xff]
        %v322 = vld [vmem:[%s192 + $0x2c8] sm:$0xff]
        %v323 = vld [vmem:[%s192 + $0x2d0] sm:$0xff]
        %v324 = vld [vmem:[%s192 + $0x2d8] sm:$0xff]
        %v325 = vld [vmem:[%s192 + $0x2e0] sm:$0xff]
        %v326 = vld [vmem:[%s192 + $0x2e8] sm:$0xff]
        %v327 = vld [vmem:[%s192 + $0x2f0] sm:$0xff]
        %v328 = vld [vmem:[%s192 + $0x2f8] sm:$0xff]
        %v330 = vperm.slane %v232, 0
        %v331 = vperm.slane %v232, 1
        %v332 = vperm.slane %v232, 2
        %vm335 = vcmask 359424
        %v336 = vsel %vm335, %v332, 0
        %v339 = vsel %vm335, %v235, 0
        %v342 = vsel %vm335, %v238, 0
        %v345 = vsel %vm335, %v241, 0
        %v348 = vsel %vm335, %v244, 0
        %v351 = vsel %vm335, %v247, 0
        %v354 = vsel %vm335, %v250, 0
        %v357 = vsel %vm335, %v253, 0
        %v360 = vsel %vm335, %v256, 0
        %v363 = vsel %vm335, %v259, 0
        %v366 = vsel %vm335, %v262, 0
        %v369 = vsel %vm335, %v265, 0
        %v372 = vsel %vm335, %v268, 0
        %v375 = vsel %vm335, %v271, 0
        %v378 = vsel %vm335, %v274, 0
        %v381 = vsel %vm335, %v277, 0
        %v384 = vsel %vm335, %v280, 0
        %v387 = vsel %vm335, %v283, 0
        %v390 = vsel %vm335, %v286, 0
        %v393 = vsel %vm335, %v289, 0
        %v396 = vsel %vm335, %v292, 0
        %v399 = vsel %vm335, %v295, 0
        %v402 = vsel %vm335, %v298, 0
        %v405 = vsel %vm335, %v301, 0
        %v408 = vsel %vm335, %v304, 0
        %v411 = vsel %vm335, %v307, 0
        %v414 = vsel %vm335, %v310, 0
        %v417 = vsel %vm335, %v313, 0
        %v420 = vsel %vm335, %v316, 0
        %v423 = vsel %vm335, %v319, 0
        %v426 = vsel %vm335, %v322, 0
        %v429 = vsel %vm335, %v325, 0
        %v432 = vsel %vm335, %v328, 0
        %434 = vmatpush.xpose.msra.mxu0 %v278
        %435 = vmatpush.xpose.msra.mxu0 %v275
        %436 = vmatpush.xpose.msra.mxu0 %v272
        %437 = vmatpush.xpose.msra.mxu0 %v269
        %438 = vmatpush.xpose.msra.mxu0 %v266
        %439 = vmatpush.xpose.msra.mxu0 %v263
        %440 = vmatpush.xpose.msra.mxu0 %v260
        %441 = vmatpush.xpose.msra.mxu0 %v257
        %442 = vmatpush.xpose.msra.mxu0 %v254
        %443 = vmatpush.xpose.msra.mxu0 %v251
        %444 = vmatpush.xpose.msra.mxu0 %v248
        %445 = vmatpush.xpose.msra.mxu0 %v245
        %446 = vmatpush.xpose.msra.mxu0 %v242
        %447 = vmatpush.xpose.msra.mxu0 %v239
        %448 = vmatpush.xpose.msra.mxu0 %v236
        %449 = vmatpush.xpose.msra.mxu0 %v233
        %450 = vmatmul.f32.gmra.mxu0 %v330
        %v451 = vpop.f32.mrf.mxu0
        %v452 = vadd.f32 0.0, %v451
        %453 = vdwg.mxu0
        %454 = vmatpush.xpose.msra.mxu0 %v279
        %455 = vmatpush.xpose.msra.mxu0 %v276
        %456 = vmatpush.xpose.msra.mxu0 %v273
        %457 = vmatpush.xpose.msra.mxu0 %v270
        %458 = vmatpush.xpose.msra.mxu0 %v267
        %459 = vmatpush.xpose.msra.mxu0 %v264
        %460 = vmatpush.xpose.msra.mxu0 %v261
        %461 = vmatpush.xpose.msra.mxu0 %v258
        %462 = vmatpush.xpose.msra.mxu0 %v255
        %463 = vmatpush.xpose.msra.mxu0 %v252
        %464 = vmatpush.xpose.msra.mxu0 %v249
        %465 = vmatpush.xpose.msra.mxu0 %v246
        %466 = vmatpush.xpose.msra.mxu0 %v243
        %467 = vmatpush.xpose.msra.mxu0 %v240
        %468 = vmatpush.xpose.msra.mxu0 %v237
        %469 = vmatpush.xpose.msra.mxu0 %v234
        %470 = vmatmul.f32.gmra.mxu0 %v331
        %v471 = vpop.f32.mrf.mxu0
        %v472 = vadd.f32 %v452, %v471
        %473 = vdwg.mxu0
        %474 = vmatpush.xpose.msra.mxu0 %v384
        %475 = vmatpush.xpose.msra.mxu0 %v381
        %476 = vmatpush.xpose.msra.mxu0 %v378
        %477 = vmatpush.xpose.msra.mxu0 %v375
        %478 = vmatpush.xpose.msra.mxu0 %v372
        %479 = vmatpush.xpose.msra.mxu0 %v369
        %480 = vmatpush.xpose.msra.mxu0 %v366
        %481 = vmatpush.xpose.msra.mxu0 %v363
        %482 = vmatpush.xpose.msra.mxu0 %v360
        %483 = vmatpush.xpose.msra.mxu0 %v357
        %484 = vmatpush.xpose.msra.mxu0 %v354
        %485 = vmatpush.xpose.msra.mxu0 %v351
        %486 = vmatpush.xpose.msra.mxu0 %v348
        %487 = vmatpush.xpose.msra.mxu0 %v345
        %488 = vmatpush.xpose.msra.mxu0 %v342
        %489 = vmatpush.xpose.msra.mxu0 %v339
        %490 = vmatmul.f32.gmra.mxu0 %v336
        %v491 = vpop.f32.mrf.mxu0
        %v492 = vadd.f32 %v472, %v491
        %493 = vdwg.mxu0
        %494 = vmatpush.xpose.msra.mxu0 %v326
        %495 = vmatpush.xpose.msra.mxu0 %v323
        %496 = vmatpush.xpose.msra.mxu0 %v320
        %497 = vmatpush.xpose.msra.mxu0 %v317
        %498 = vmatpush.xpose.msra.mxu0 %v314
        %499 = vmatpush.xpose.msra.mxu0 %v311
        %500 = vmatpush.xpose.msra.mxu0 %v308
        %501 = vmatpush.xpose.msra.mxu0 %v305
        %502 = vmatpush.xpose.msra.mxu0 %v302
        %503 = vmatpush.xpose.msra.mxu0 %v299
        %504 = vmatpush.xpose.msra.mxu0 %v296
        %505 = vmatpush.xpose.msra.mxu0 %v293
        %506 = vmatpush.xpose.msra.mxu0 %v290
        %507 = vmatpush.xpose.msra.mxu0 %v287
        %508 = vmatpush.xpose.msra.mxu0 %v284
        %509 = vmatpush.xpose.msra.mxu0 %v281
        %510 = vmatmul.f32.gmra.mxu0 %v330
        %v511 = vpop.f32.mrf.mxu0
        %v512 = vadd.f32 0.0, %v511
        %513 = vdwg.mxu0
        %514 = vmatpush.xpose.msra.mxu0 %v327
        %515 = vmatpush.xpose.msra.mxu0 %v324
        %516 = vmatpush.xpose.msra.mxu0 %v321
        %517 = vmatpush.xpose.msra.mxu0 %v318
        %518 = vmatpush.xpose.msra.mxu0 %v315
        %519 = vmatpush.xpose.msra.mxu0 %v312
        %520 = vmatpush.xpose.msra.mxu0 %v309
        %521 = vmatpush.xpose.msra.mxu0 %v306
        %522 = vmatpush.xpose.msra.mxu0 %v303
        %523 = vmatpush.xpose.msra.mxu0 %v300
        %524 = vmatpush.xpose.msra.mxu0 %v297
        %525 = vmatpush.xpose.msra.mxu0 %v294
        %526 = vmatpush.xpose.msra.mxu0 %v291
        %527 = vmatpush.xpose.msra.mxu0 %v288
        %528 = vmatpush.xpose.msra.mxu0 %v285
        %529 = vmatpush.xpose.msra.mxu0 %v282
        %530 = vmatmul.f32.gmra.mxu0 %v331
        %v531 = vpop.f32.mrf.mxu0
        %v532 = vadd.f32 %v512, %v531
        %533 = vdwg.mxu0
        %534 = vmatpush.xpose.msra.mxu0 %v432
        %535 = vmatpush.xpose.msra.mxu0 %v429
        %536 = vmatpush.xpose.msra.mxu0 %v426
        %537 = vmatpush.xpose.msra.mxu0 %v423
        %538 = vmatpush.xpose.msra.mxu0 %v420
        %539 = vmatpush.xpose.msra.mxu0 %v417
        %540 = vmatpush.xpose.msra.mxu0 %v414
        %541 = vmatpush.xpose.msra.mxu0 %v411
        %542 = vmatpush.xpose.msra.mxu0 %v408
        %543 = vmatpush.xpose.msra.mxu0 %v405
        %544 = vmatpush.xpose.msra.mxu0 %v402
        %545 = vmatpush.xpose.msra.mxu0 %v399
        %546 = vmatpush.xpose.msra.mxu0 %v396
        %547 = vmatpush.xpose.msra.mxu0 %v393
        %548 = vmatpush.xpose.msra.mxu0 %v390
        %549 = vmatpush.xpose.msra.mxu0 %v387
        %550 = vmatmul.f32.gmra.mxu0 %v336
        %v551 = vpop.f32.mrf.mxu0
        %v552 = vadd.f32 %v532, %v551
        %553 = vdwg.mxu0
        %v554 = vtanh.pop %v492
        %v555 = vtanh.pop %v552
        %v558 = vrot.slane %v555, 7
        %vm559 = vcmask 1040384
        %v560 = vsel %vm559, %v554, %v558
        %v562 = vlaneseq
        %vm563 = vcmp.ge.s32.totalorder %v562, 0
        %vm564 = vcmp.lt.s32.totalorder %v562, 256
        %vm565 = vmand %vm563, %vm564
        %566 = vst.msk [vmem:[%s215] sm:$0x3] %vm565, %v560
        %s567 = sand.u32 %s98, 1
        %s568 = scalar_lea.sflag [#allocation5], %s567
        %s569 = sand.u32 %s98, 1
        %s570 = smul.addr %s569, 2
        %s571 = scalar_lea.vmem [#allocation8], %s570
        // Predicated region
        $region41: #{tpu_custom_call.1} parent=31 // pred_check
          %p572 = pneg %p108
        $region42: #{tpu_custom_call.1} parent=31 // pred_check_branch
          %574 = sbr.rel (%p572) target = $region44
        $region43: #{tpu_custom_call.1} parent=31 // pred_region
          %s575 = smul.u32 2, %s22
          %s576 = ssub.s32 3, %s575
          %p577 = scmp.lt.s32.totalorder %s576, 2
          %s578 = scalar_select %p577, %s576, 2
          %s579 = ssub.s32 2, %s578
          %s580 = sshll.u32 %s579, 4
          %581 = vsyncadd %s568, %s580
          %p582 = scmp.ne.s32.totalorder 0, %s578
          %s583 = scalar_lea.hbm %s3, %s575
          %s584 = sshll.u32 %s578, 4
          %s585 = sshll.u32 %s571, 4
          %s586 = int_to_ptr.vmem [resolvable:$true] %s585
          %s587 = sshll.u32 %s583, 4
          %s588 = int_to_ptr.hbm [resolvable:$true] %s587
          %590 = dma.vmem_to_hbm [thread:$0]  (%p582), %s586, %s584, %s588, %s568
        $region44: #{tpu_custom_call.1} parent=31 // pred_fallthru
          _
      $region32: #{tpu_custom_call.1} parent=5 // pred_fallthru
        _
      %p591 = scmp.le.s32.totalorder 2, %s17
      // Predicated region
      $region45: #{tpu_custom_call.1} parent=5 // pred_check
        %p592 = pneg %p591
      $region46: #{tpu_custom_call.1} parent=5 // pred_check_branch
        %594 = sbr.rel (%p592) target = $region48
      $region47: #{tpu_custom_call.1} parent=5 // pred_region
        %s595 = ssub.s32 %s17, 2
        // Predicated region
        $region49: #{tpu_custom_call.1} parent=47 // pred_check
          %p596 = pneg %p114
        $region50: #{tpu_custom_call.1} parent=47 // pred_check_branch
          %598 = sbr.rel (%p596) target = $region52
        $region51: #{tpu_custom_call.1} parent=47 // pred_region
          %s599 = sand.u32 %s99, 1
          %s600 = scalar_lea.sflag [#allocation5], %s599
          %s601 = sand.u32 %s99, 1
          %s602 = smul.addr %s601, 2
          %s603 = scalar_lea.vmem [#allocation8], %s602
          %605 = dma.done %s600, 32
        $region52: #{tpu_custom_call.1} parent=47 // pred_fallthru
          _
      $region48: #{tpu_custom_call.1} parent=5 // pred_fallthru
        _
    $region6: #{tpu_custom_call.1} parent=1 // loop_footer
      %s21 = sadd.s32 1, %s17
    $region7: #{tpu_custom_call.1} parent=1 // loop_footer_branch
      %16 = sbr.rel target = $region3
    $region8: #{tpu_custom_call.1} parent=1 // loop_exit
      _
    %606 = vsyncpa [#allocation4], 1
    %s607 = scalar_lea.sflag [#allocation4], 1
    %608 = vsyncpa %s607, 1
    %609 = vsyncpa [#allocation7], 1
    %s610 = scalar_lea.sflag [#allocation7], 1
    %611 = vsyncpa %s610, 1
    %612 = vsyncpa [#allocation5], 1
    %s613 = scalar_lea.sflag [#allocation5], 1
    %614 = vsyncpa %s613, 1

</llo_original>
